<compile_context>
chip_gen: v7x
topology: tpu7x:2x2x1
jax: 0.10.0
libtpu: 0.0.40
codegen_flags: <defaults>
</compile_context>

<pallas_src>
import functools

import jax
import jax.numpy as jnp
import numpy as np
from jax.experimental import pallas as pl
from jax.experimental.pallas import tpu as pltpu


def _strip_att_kernel(w_ref, x_ref, o_ref, *, kernel, width, hw):
    """One row block: w_ref (tr, kernel), x_ref / o_ref (tr, H*W)."""
    pad = kernel // 2
    x = x_ref[...].astype(jnp.float32)          # (tr, hw)
    wts = w_ref[...].astype(jnp.float32)        # (tr, kernel)

    # Column (w) coordinate of every lane.  The iota + mod run on a single
    # sublane strip; only the int32 sublane broadcast and the <= 2*pad
    # compares touch the full block, and they are hoisted out of the tap loop.
    col = jax.lax.broadcasted_iota(jnp.int32, (1, hw), 1) % width
    col = jnp.broadcast_to(col, x.shape)
    left_masks = {wb: col == wb for wb in range(pad)}
    right_masks = {wb: col == wb for wb in range(width - pad, width)}

    def wcol(j):                                 # (tr, 1) per-row scalar weight
        return wts[:, j:j + 1]

    def reflected_tap(d, get_roll):
        """x[., h, w + d] with ReflectionPad2d semantics at the W boundary."""
        t = get_roll(d)
        # Left edge (only d < 0):  w + d < 0  ->  x[h, -(w + d)]
        for wb in range(0, -d):
            t = jnp.where(left_masks[wb], get_roll(-2 * wb - d), t)
        # Right edge (only d > 0): w + d >= W ->  x[h, 2*(W-1) - (w + d)]
        for wb in range(width - d, width):
            t = jnp.where(right_masks[wb], get_roll(2 * (width - 1 - wb) - d), t)
        return t

    # Centre tap initialises the accumulator (no roll, no boundary fix-up).
    acc = wcol(pad) * x

    # Remaining taps in +/-mag pairs: only x, the rolls needed by the current
    # pair and the accumulator are live at any point (no full rolls dict).
    for mag in range(1, pad + 1):
        cache = {0: x}

        def get_roll(s, _cache=cache):
            if s not in _cache:
                _cache[s] = pltpu.roll(x, shift=(-s) % hw, axis=1)
            return _cache[s]

        acc = acc + wcol(pad - mag) * reflected_tap(-mag, get_roll)
        acc = acc + wcol(pad + mag) * reflected_tap(+mag, get_roll)

    o_ref[...] = acc.astype(o_ref.dtype)


def _pick_block_rows(total_rows, hw, *, target_bytes=2 << 20, max_rows=1024):
    """Largest row chunk (multiple of 8 sublanes, ~target_bytes of f32)."""
    tr = (target_bytes // (hw * 4)) // 8 * 8
    tr = max(8, min(tr, max_rows))
    if tr >= total_rows:
        return total_rows                        # full axis is always legal
    return tr


def spatial_strip_att(x, conv_w, *, group=2, kernel=5, block_rows=None):
    """x: (N, C, H, W); conv_w: (group*kernel, C).  H=True branch of the module."""
    n, c, h, w = x.shape
    pad = kernel // 2
    assert kernel % 2 == 1, "odd strip kernel expected (module default is 5)"
    assert c % group == 0, "channels must be divisible by group"
    assert conv_w.shape == (group * kernel, c)
    assert w > pad, "reflection padding requires W > kernel//2"
    cg = c // group
    hw = h * w
    rows = n * c

    # Hoisted gate: AdaptiveAvgPool2d((1,1)) + 1x1 conv (no bias) + sigmoid.
    # It depends on the GLOBAL (H, W) mean, so it cannot live inside the
    # spatially tiled kernel.
    # TODO(synk): the mean is an extra HBM read of x; fuse it with x's producer
    # when this module is embedded in a full network.
    m = jnp.mean(x.astype(jnp.float32), axis=(2, 3))            # (N, C)
    filt = jax.nn.sigmoid(m @ conv_w.astype(jnp.float32).T)     # (N, group*kernel)

    # Per-row gate weights: row r = n*C + g*cg + ci  ->  filt[n, g, :].
    w_rows = jnp.broadcast_to(
        filt.reshape(n, group, 1, kernel), (n, group, cg, kernel)
    ).reshape(rows, kernel)

    # Lane-dense layout: contiguous reshape, no data movement.  H*W is kept as
    # the full last axis (unmasked stores whenever H*W % 128 == 0).
    xr = x.reshape(rows, hw)

    tr = block_rows or _pick_block_rows(rows, hw)
    grid = (pl.cdiv(rows, tr),)

    kfn = functools.partial(_strip_att_kernel, kernel=kernel, width=w, hw=hw)
    out = pl.pallas_call(
        kfn,
        out_shape=jax.ShapeDtypeStruct((rows, hw), x.dtype),
        grid_spec=pltpu.PrefetchScalarGridSpec(
            num_scalar_prefetch=0,
            grid=grid,
            in_specs=[
                pl.BlockSpec((tr, kernel), lambda i: (i, 0)),   # per-row weights
                pl.BlockSpec((tr, hw), lambda i: (i, 0)),       # image rows
            ],
            out_specs=pl.BlockSpec((tr, hw), lambda i: (i, 0)),
        ),
        compiler_params=pltpu.CompilerParams(
            dimension_semantics=("parallel",)),
    )(w_rows, xr)

    return out.reshape(n, c, h, w)


def _reference(x, conv_w, *, group=2, kernel=5):
    """Pure-JAX reproduction of the PyTorch forward (for validation)."""
    n, c, h, w = x.shape
    pad = kernel // 2
    m = x.mean(axis=(2, 3))                                        # (n, c)
    filt = jax.nn.sigmoid(m @ conv_w.T).reshape(n, group, kernel)
    xp = jnp.pad(x, ((0, 0), (0, 0), (0, 0), (pad, pad)), mode="reflect")
    taps = jnp.stack([xp[..., j:j + w] for j in range(kernel)], axis=2)  # (n,c,k,h,w)
    taps = taps.reshape(n, group, c // group, kernel, h, w)
    out = jnp.einsum("ngckhw,ngk->ngchw", taps, filt).reshape(n, c, h, w)
    return out


if __name__ == "__main__":
    # Module config: dim=4, kernel=5, group=2, H=True.
    dim, kernel, group = 4, 5, 2
    key = jax.random.PRNGKey(0)
    kx, kw = jax.random.split(key)

    x = jax.random.normal(kx, (2, dim, 16, 16), dtype=jnp.float32)

    # Conv2d(dim, group*kernel, 1, bias=False) weight, stored as (group*kernel, dim).
    bound = 1.0 / np.sqrt(dim)
    conv_w = jax.random.uniform(kw, (group * kernel, dim),
                                minval=-bound, maxval=bound, dtype=jnp.float32)

    fwd = jax.jit(functools.partial(spatial_strip_att, group=group, kernel=kernel))
    out = jax.block_until_ready(fwd(x, conv_w))

    ref = _reference(x, conv_w, group=group, kernel=kernel)
    np.testing.assert_allclose(np.asarray(out), np.asarray(ref),
                               rtol=1e-5, atol=1e-5)

    print("KERNEL_OK")
</pallas_src>

<mosaic_0001>
module attributes {stable_mosaic.version = 11 : i64} {
  func.func @_strip_att_kernel(%arg0: i32, %arg1: memref<8x5xf32, #tpu.memory_space<vmem>>, %arg2: memref<8x256xf32, #tpu.memory_space<vmem>>, %arg3: memref<8x256xf32, #tpu.memory_space<vmem>>) attributes {dimension_semantics = [#tpu.dimension_semantics<parallel>], iteration_bounds = array<i64: 1>, scalar_prefetch = 0 : i64, scratch_operands = 0 : i64, tpu.core_type = #tpu.core_type<tc>, window_params = [{transform_indices = @transform_0, window_bounds = array<i64: 8, 5>}, {transform_indices = @transform_1, window_bounds = array<i64: 8, 256>}, {transform_indices = @transform_2, window_bounds = array<i64: 8, 256>}]} {
    %c0 = arith.constant 0 : index
    %c0_0 = arith.constant 0 : index
    %0 = vector.load %arg2[%c0, %c0_0] : memref<8x256xf32, #tpu.memory_space<vmem>>, vector<8x256xf32>
    %c0_1 = arith.constant 0 : index
    %c0_2 = arith.constant 0 : index
    %1 = vector.load %arg1[%c0_1, %c0_2] : memref<8x5xf32, #tpu.memory_space<vmem>>, vector<8x5xf32>
    %2 = tpu.iota {dimensions = array<i32: 1>} : vector<1x256xi32>
    %c16_i32 = arith.constant 16 : i32
    %c0_i32 = arith.constant 0 : i32
    %3 = arith.cmpi eq, %c16_i32, %c0_i32 : i32
    %c1_i32 = arith.constant 1 : i32
    %4 = arith.select %3, %c1_i32, %c16_i32 : i32
    %5 = vector.broadcast %4 : i32 to vector<1x256xi32>
    %6 = arith.remsi %2, %5 : vector<1x256xi32>
    %c0_i32_3 = arith.constant 0 : i32
    %7 = vector.broadcast %c0_i32_3 : i32 to vector<1x256xi32>
    %8 = arith.cmpi ne, %6, %7 : vector<1x256xi32>
    %c0_i32_4 = arith.constant 0 : i32
    %9 = vector.broadcast %c0_i32_4 : i32 to vector<1x256xi32>
    %10 = arith.cmpi slt, %6, %9 : vector<1x256xi32>
    %c0_i32_5 = arith.constant 0 : i32
    %11 = arith.cmpi slt, %4, %c0_i32_5 : i32
    %12 = vector.broadcast %11 : i1 to vector<1x256xi1>
    %13 = vector.broadcast %12 : vector<1x256xi1> to vector<1x256xi1>
    %14 = arith.xori %10, %13 : vector<1x256xi1>
    %15 = arith.andi %14, %8 : vector<1x256xi1>
    %16 = vector.broadcast %4 : i32 to vector<1x256xi32>
    %17 = arith.addi %6, %16 : vector<1x256xi32>
    %18 = arith.select %15, %17, %6 : vector<1x256xi1>, vector<1x256xi32>
    %19 = vector.shape_cast %18 : vector<1x256xi32> to vector<1x256xi32>
    %20 = vector.broadcast %19 : vector<1x256xi32> to vector<8x256xi32>
    %c0_i32_6 = arith.constant 0 : i32
    %21 = vector.broadcast %c0_i32_6 : i32 to vector<8x256xi32>
    %22 = arith.cmpi eq, %20, %21 : vector<8x256xi32>
    %c1_i32_7 = arith.constant 1 : i32
    %23 = vector.broadcast %c1_i32_7 : i32 to vector<8x256xi32>
    %24 = arith.cmpi eq, %20, %23 : vector<8x256xi32>
    %c14_i32 = arith.constant 14 : i32
    %25 = vector.broadcast %c14_i32 : i32 to vector<8x256xi32>
    %26 = arith.cmpi eq, %20, %25 : vector<8x256xi32>
    %c15_i32 = arith.constant 15 : i32
    %27 = vector.broadcast %c15_i32 : i32 to vector<8x256xi32>
    %28 = arith.cmpi eq, %20, %27 : vector<8x256xi32>
    %29 = vector.extract_strided_slice %1 {offsets = [0, 2], sizes = [8, 1], strides = [1, 1]} : vector<8x5xf32> to vector<8x1xf32>
    %30 = vector.broadcast %29 : vector<8x1xf32> to vector<8x256xf32>
    %31 = arith.mulf %30, %0 : vector<8x256xf32>
    %32 = vector.extract_strided_slice %1 {offsets = [0, 1], sizes = [8, 1], strides = [1, 1]} : vector<8x5xf32> to vector<8x1xf32>
    %c1_i32_8 = arith.constant 1 : i32
    %33 = tpu.dynamic_rotate %0 by %c1_i32_8 dim 1 : vector<8x256xf32>, i32 -> vector<8x256xf32>
    %c255_i32 = arith.constant 255 : i32
    %34 = tpu.dynamic_rotate %0 by %c255_i32 dim 1 : vector<8x256xf32>, i32 -> vector<8x256xf32>
    %35 = arith.select %22, %34, %33 : vector<8x256xi1>, vector<8x256xf32>
    %36 = vector.broadcast %32 : vector<8x1xf32> to vector<8x256xf32>
    %37 = arith.mulf %36, %35 : vector<8x256xf32>
    %38 = arith.addf %31, %37 : vector<8x256xf32>
    %39 = vector.extract_strided_slice %1 {offsets = [0, 3], sizes = [8, 1], strides = [1, 1]} : vector<8x5xf32> to vector<8x1xf32>
    %40 = arith.select %28, %33, %34 : vector<8x256xi1>, vector<8x256xf32>
    %41 = vector.broadcast %39 : vector<8x1xf32> to vector<8x256xf32>
    %42 = arith.mulf %41, %40 : vector<8x256xf32>
    %43 = arith.addf %38, %42 : vector<8x256xf32>
    %44 = vector.extract_strided_slice %1 {offsets = [0, 0], sizes = [8, 1], strides = [1, 1]} : vector<8x5xf32> to vector<8x1xf32>
    %c2_i32 = arith.constant 2 : i32
    %45 = tpu.dynamic_rotate %0 by %c2_i32 dim 1 : vector<8x256xf32>, i32 -> vector<8x256xf32>
    %c254_i32 = arith.constant 254 : i32
    %46 = tpu.dynamic_rotate %0 by %c254_i32 dim 1 : vector<8x256xf32>, i32 -> vector<8x256xf32>
    %47 = arith.select %22, %46, %45 : vector<8x256xi1>, vector<8x256xf32>
    %48 = arith.select %24, %0, %47 : vector<8x256xi1>, vector<8x256xf32>
    %49 = vector.broadcast %44 : vector<8x1xf32> to vector<8x256xf32>
    %50 = arith.mulf %49, %48 : vector<8x256xf32>
    %51 = arith.addf %43, %50 : vector<8x256xf32>
    %52 = vector.extract_strided_slice %1 {offsets = [0, 4], sizes = [8, 1], strides = [1, 1]} : vector<8x5xf32> to vector<8x1xf32>
    %53 = arith.select %26, %0, %46 : vector<8x256xi1>, vector<8x256xf32>
    %54 = arith.select %28, %45, %53 : vector<8x256xi1>, vector<8x256xf32>
    %55 = vector.broadcast %52 : vector<8x1xf32> to vector<8x256xf32>
    %56 = arith.mulf %55, %54 : vector<8x256xf32>
    %57 = arith.addf %51, %56 : vector<8x256xf32>
    %c0_9 = arith.constant 0 : index
    %c0_10 = arith.constant 0 : index
    %58 = vector.load %arg3[%c0_9, %c0_10] : memref<8x256xf32, #tpu.memory_space<vmem>>, vector<8x256xf32>
    tpu.vector_store %arg3[%c0_9, %c0_10], %57 {strides = array<i32>} : memref<8x256xf32, #tpu.memory_space<vmem>>, vector<8x256xf32>,
    return
  }
  func.func @transform_0(%arg0: i32) -> (i32, i32) {
    %c0_i32 = arith.constant 0 : i32
    %c0_i32_0 = arith.constant 0 : i32
    return %arg0, %c0_i32 : i32, i32
  }
  func.func @transform_1(%arg0: i32) -> (i32, i32) {
    %c0_i32 = arith.constant 0 : i32
    %c0_i32_0 = arith.constant 0 : i32
    return %arg0, %c0_i32 : i32, i32
  }
  func.func @transform_2(%arg0: i32) -> (i32, i32) {
    %c0_i32 = arith.constant 0 : i32
    %c0_i32_0 = arith.constant 0 : i32
    return %arg0, %c0_i32 : i32, i32
  }
}

</mosaic_0001>

<llo_original>
// kernel: spatial_strip_att.1
$region0: #{spatial_strip_att.1}
  #allocation0 [shape = 'u32[]', space=smem, size = 0x4, offset = 0x4, fixed_abs, tag = 'smem constant byte address 0x4 - core index']
  #allocation1 [shape = 'u32[144,128]{1,0:T(1,128)}', space=vmem, size = 0x12000, scoped, tag = 'internal scratch']
  %s0 = inlined_call_operand.vmem [shape: f32[8,5], index: 0, kind: input, shape index: {}]
  %s1 = inlined_call_operand.vmem [shape: f32[8,256], index: 1, kind: input, shape index: {}]
  %s2 = inlined_call_operand.vmem [shape: f32[8,256], index: 2, kind: output, shape index: {}]
  %s3 = sld [smem:[#allocation0]]
  $region18: #{spatial_strip_att.1} parent=0
    _
  %s5 = ssub.s32 1, %s3
  %s6 = scalar_select 0, %s5, %s3
  // Predicated region
  $region2: #{spatial_strip_att.1} parent=0 // pred_check
    _
  $region3: #{spatial_strip_att.1} parent=0 // pred_check_branch
    %8 = sbr.rel (0) target = $region5
  $region4: #{spatial_strip_att.1} parent=0 // pred_region
    _
  $region5: #{spatial_strip_att.1} parent=0 // pred_fallthru
    _
  // Predicated region
  $region6: #{spatial_strip_att.1} parent=0 // pred_check
    _
  $region7: #{spatial_strip_att.1} parent=0 // pred_check_branch
    %10 = sbr.rel (0) target = $region9
  $region8: #{spatial_strip_att.1} parent=0 // pred_region
    _
  $region9: #{spatial_strip_att.1} parent=0 // pred_fallthru
    _
  %v11 = vld [vmem:[%s1] sm:$0xff]
  %v12 = vld [vmem:[%s1 + $0x8] sm:$0xff]
  %v13 = vld [vmem:[%s0] sm:$0xff]
  %v14 = vlaneseq
  %v15 = vand.u32 %v14, 127
  %v16 = vadd.s32 %v15, 128
  %vm17 = vcmp.lt.s32.totalorder %v15, 0
  %v18 = vsub.s32 0, %v15
  %v19 = vsel %vm17, %v18, %v15
  %v20 = vshrl.u32 %v19, 4
  %v21 = vand.u32 %v19, 15
  %v22 = vsub.s32 0, %v21
  %v23 = vsel %vm17, %v22, %v21
  %vm24 = vcmp.lt.s32.totalorder %v16, 0
  %v25 = vsub.s32 0, %v16
  %v26 = vsel %vm24, %v25, %v16
  %v27 = vshrl.u32 %v26, 4
  %v28 = vand.u32 %v26, 15
  %v29 = vsub.s32 0, %v28
  %v30 = vsel %vm24, %v29, %v28
  %vm31 = vcmp.ne.s32.totalorder %v23, 0
  %vm32 = vcmp.ne.s32.totalorder %v30, 0
  %vm33 = vcmp.lt.s32.totalorder %v23, 0
  %vm34 = vcmp.lt.s32.totalorder %v30, 0
  %vm35 = vmand %vm33, %vm31
  %vm36 = vmand %vm34, %vm32
  %v37 = vadd.s32 %v23, 16
  %v38 = vadd.s32 %v30, 16
  %v39 = vsel %vm35, %v37, %v23
  %v40 = vsel %vm36, %v38, %v30
  %vm41 = vcmp.eq.s32.totalorder %v39, 0
  %vm42 = vcmp.eq.s32.totalorder %v40, 0
  %vm43 = vcmp.eq.s32.totalorder %v39, 1
  %vm44 = vcmp.eq.s32.totalorder %v40, 1
  %vm45 = vcmp.eq.s32.totalorder %v39, 14
  %vm46 = vcmp.eq.s32.totalorder %v40, 14
  %vm47 = vcmp.eq.s32.totalorder %v39, 15
  %vm48 = vcmp.eq.s32.totalorder %v40, 15
  %50 = vset.pattern.permute.xlu0 2
  %51 = vperm.xlu0 %50, %v13
  %v52 = vpop.permute.xlu0 %51
  %v54 = vmul.f32 %v52, %v11
  %v55 = vmul.f32 %v52, %v12
  %56 = vrot.lane.b32.xlu0 %v11, 1
  %v57 = vpop.permute.xlu0 %56
  %58 = vrot.lane.b32.xlu0 %v12, 1
  %v59 = vpop.permute.xlu0 %58
  %vm60 = vcmp.lt.s32.totalorder %v15, 1
  %v61 = vsel %vm60, %v57, %v59
  %v62 = vsel %vm60, %v59, %v57
  %63 = vrot.lane.b32.xlu0 %v11, 127
  %v64 = vpop.permute.xlu0 %63
  %65 = vrot.lane.b32.xlu0 %v12, 127
  %v66 = vpop.permute.xlu0 %65
  %vm67 = vcmp.lt.s32.totalorder %v15, 127
  %v68 = vsel %vm67, %v64, %v66
  %v69 = vsel %vm67, %v66, %v64
  %v70 = vsel %vm41, %v68, %v62
  %v71 = vsel %vm42, %v69, %v61
  %72 = vset.pattern.permute.xlu0 1
  %73 = vperm.xlu0 %72, %v13
  %v74 = vpop.permute.xlu0 %73
  %v76 = vmul.f32 %v74, %v70
  %v77 = vmul.f32 %v74, %v71
  %v78 = vadd.f32 %v54, %v76
  %v79 = vadd.f32 %v55, %v77
  %v80 = vsel %vm47, %v62, %v68
  %v81 = vsel %vm48, %v61, %v69
  %82 = vset.pattern.permute.xlu0 3
  %83 = vperm.xlu0 %82, %v13
  %v84 = vpop.permute.xlu0 %83
  %v86 = vmul.f32 %v84, %v80
  %v87 = vmul.f32 %v84, %v81
  %v88 = vadd.f32 %v78, %v86
  %v89 = vadd.f32 %v79, %v87
  %90 = vrot.lane.b32.xlu0 %v11, 2
  %v91 = vpop.permute.xlu0 %90
  %92 = vrot.lane.b32.xlu0 %v12, 2
  %v93 = vpop.permute.xlu0 %92
  %vm94 = vcmp.lt.s32.totalorder %v15, 2
  %v95 = vsel %vm94, %v91, %v93
  %v96 = vsel %vm94, %v93, %v91
  %97 = vrot.lane.b32.xlu0 %v11, 126
  %v98 = vpop.permute.xlu0 %97
  %99 = vrot.lane.b32.xlu0 %v12, 126
  %v100 = vpop.permute.xlu0 %99
  %vm101 = vcmp.lt.s32.totalorder %v15, 126
  %v102 = vsel %vm101, %v98, %v100
  %v103 = vsel %vm101, %v100, %v98
  %v104 = vsel %vm41, %v102, %v96
  %v105 = vsel %vm42, %v103, %v95
  %v106 = vsel %vm43, %v11, %v104
  %v107 = vsel %vm44, %v12, %v105
  %108 = vset.pattern.permute.xlu0 0
  %109 = vperm.xlu0 %108, %v13
  %v110 = vpop.permute.xlu0 %109
  %v112 = vmul.f32 %v110, %v106
  %v113 = vmul.f32 %v110, %v107
  %v114 = vadd.f32 %v88, %v112
  %v115 = vadd.f32 %v89, %v113
  %v116 = vsel %vm45, %v11, %v102
  %v117 = vsel %vm46, %v12, %v103
  %v118 = vsel %vm47, %v96, %v116
  %v119 = vsel %vm48, %v95, %v117
  %120 = vset.pattern.permute.xlu0 4
  %121 = vperm.xlu0 %120, %v13
  %v122 = vpop.permute.xlu0 %121
  %v124 = vmul.f32 %v122, %v118
  %v125 = vmul.f32 %v122, %v119
  %v126 = vadd.f32 %v114, %v124
  %v127 = vadd.f32 %v115, %v125
  %128 = vst [vmem:[%s2] sm:$0xff] %v126
  %129 = vst [vmem:[%s2 + $0x8] sm:$0xff] %v127
  // Predicated region
  $region10: #{spatial_strip_att.1} parent=0 // pred_check
    _
  $region11: #{spatial_strip_att.1} parent=0 // pred_check_branch
    %131 = sbr.rel (0) target = $region13
  $region12: #{spatial_strip_att.1} parent=0 // pred_region
    _
  $region13: #{spatial_strip_att.1} parent=0 // pred_fallthru
    _
  // Predicated region
  $region14: #{spatial_strip_att.1} parent=0 // pred_check
    _
  $region15: #{spatial_strip_att.1} parent=0 // pred_check_branch
    %133 = sbr.rel (0) target = $region17
  $region16: #{spatial_strip_att.1} parent=0 // pred_region
    _
  $region17: #{spatial_strip_att.1} parent=0 // pred_fallthru
    _

</llo_original>
